<compile_context>
chip_gen: v6e
topology: v6e:2x2x1
jax: 0.10.0
libtpu: 0.0.40
codegen_flags: <defaults>
</compile_context>

<pallas_src>
import functools

import jax
import jax.numpy as jnp
from jax.experimental import pallas as pl
from jax.experimental.pallas import tpu as pltpu


_UNROLL_CLASS_LIMIT = 32  # fully unroll the class loop below this many classes


def _vmem_capacity_bytes():
    """Per-TensorCore VMEM capacity (128 MiB on v5e/v6e, 64 MiB on v7x)."""
    try:
        cap = getattr(pltpu.get_tpu_info(), "vmem_capacity_bytes", None)
        if cap:
            return int(cap)
    except Exception:
        pass
    return 64 * 1024 * 1024  # conservative (v7x)


def _ce_kernel(score_ref, labels_ref, out_ref, *, num_classes, row_chunk,
               h, w, ignore_label, need_row_mask, need_col_mask):
    """Partial cross-entropy sum over one (1, C, TH, TW) logits tile.

    The class reduction runs along the LEADING axis (plain VPU max/add over
    per-class slabs, no XLU), one (row_chunk, TW) slab at a time, so bf16
    inputs are only upcast one slab at a time.

    Assumption (matches the reference): labels are either `ignore_label` or
    in [0, num_classes); any other value silently contributes only the
    log-sum-exp term (PyTorch would raise instead).
    """
    hb = pl.program_id(1)
    wb = pl.program_id(2)
    _, th, tw = labels_ref.shape
    n_chunks = th // row_chunk

    def chunk_body(r, acc):
        r0 = r * row_chunk
        if not isinstance(r0, int):                      # dynamic sublane offset
            r0 = pl.multiple_of(r0, row_chunk)
        labels = labels_ref[0, pl.ds(r0, row_chunk), :]  # (RC, TW) int32

        def slab(c):                                     # (RC, TW), native dtype
            return score_ref[0, c, pl.ds(r0, row_chunk), :]

        # ---- pass 1: running max over classes, kept in the input dtype ----
        if num_classes <= _UNROLL_CLASS_LIMIT:
            m = slab(0)
            for c in range(1, num_classes):
                m = jnp.maximum(m, slab(c))
        else:
            m = jax.lax.fori_loop(
                1, num_classes, lambda c, m: jnp.maximum(m, slab(c)), slab(0))
        m = m.astype(jnp.float32)

        # ---- pass 2: x = logit - m;  loss = log(sum exp(x)) - sum(eq * x) ----
        # (the +-m terms cancel for valid pixels, saving VALU work)
        def ce_step(c, carry):
            s, p = carry
            x = slab(c).astype(jnp.float32) - m          # per-slab upcast only
            s = s + jnp.exp(x)
            p = p + jnp.where(labels == c, x, 0.0)
            return s, p

        init = (jnp.zeros((row_chunk, tw), jnp.float32),
                jnp.zeros((row_chunk, tw), jnp.float32))
        if num_classes <= _UNROLL_CLASS_LIMIT:
            s, p = init
            for c in range(num_classes):
                s, p = ce_step(c, (s, p))
        else:
            s, p = jax.lax.fori_loop(0, num_classes, ce_step, init)

        # ---- mask ignored / out-of-bounds pixels BEFORE accumulating, so
        # garbage in ragged-edge blocks can never leak NaN/Inf into the sum.
        valid = labels != ignore_label
        if need_row_mask:
            rows = (jax.lax.broadcasted_iota(jnp.int32, (row_chunk, tw), 0)
                    + hb * th + r0)
            valid &= rows < h
        if need_col_mask:
            cols = (jax.lax.broadcasted_iota(jnp.int32, (row_chunk, tw), 1)
                    + wb * tw)
            valid &= cols < w
        return acc + jnp.where(valid, jnp.log(s) - p, 0.0)

    zeros = jnp.zeros((row_chunk, tw), jnp.float32)
    if n_chunks == 1:
        acc = chunk_body(0, zeros)
    else:
        acc = jax.lax.fori_loop(0, n_chunks, chunk_body, zeros)

    out_ref[0] = jnp.sum(acc, keepdims=True)             # per-tile partial sum


def cross_entropy(score, target, ignore_label=-1):
    """Equivalent of CrossEntropy.forward(score, target)."""
    N, C, ph, pw = score.shape
    _, h, w = target.shape

    if (ph, pw) != (h, w):
        # F.upsample(mode='bilinear', align_corners=False) == half-pixel-center
        # bilinear resize.  Kept in the INPUT dtype; no pad/copy pass follows.
        # TODO(synk): fuse the upsample into the kernel (per-tile interpolation
        # matrices on the MXU) to avoid materializing the full-res logits in HBM.
        score = jax.image.resize(score, (N, C, h, w), method="bilinear",
                                 antialias=False).astype(score.dtype)

    labels = target.astype(jnp.int32)
    itemsize = jnp.dtype(score.dtype).itemsize

    # ---- generation-aware VMEM budgets ------------------------------------
    vmem_cap = _vmem_capacity_bytes()          # 128 MiB (v5e/v6e) / 64 MiB (v7x)
    tile_budget = vmem_cap // 4                # double-buffered input stream budget
    bytes_per_px = 2 * (C * itemsize + 4)      # 2x-buffered logits + int32 labels

    # ---- tile shape: W on lanes, H on sublanes, classes on the leading axis
    tw_cap = max(128, min(1024, (tile_budget // (8 * bytes_per_px)) // 128 * 128))
    if w <= tw_cap:
        TW = w                                  # == full array dim -> always legal
    else:
        TW = tw_cap                             # multiple of 128; edge masked in-kernel
    GW = pl.cdiv(w, TW)

    if h < 8:
        TH = h                                  # == full array dim -> legal
        row_chunk = h
    else:
        th_cap = max(8, min(512, (tile_budget // (bytes_per_px * TW)) // 8 * 8))
        TH = min(th_cap, (h // 8) * 8)          # multiple of 8; edge masked in-kernel
        row_chunk = 8                           # inner chunk keeps carries in vregs
    GH = pl.cdiv(h, TH)

    # Keep enough independent tiles for pipelining and, on v7x, for both
    # TensorCores (all grid axes are "parallel").
    while N * GH * GW < 4 and TH > 8:
        TH = max(8, ((TH // 2) // 8) * 8)
        GH = pl.cdiv(h, TH)

    need_row_mask = (GH * TH) != h
    need_col_mask = (GW * TW) != w

    vmem_need = bytes_per_px * TH * TW + (2 << 20)
    vmem_limit = int(min(int(0.85 * vmem_cap), max(32 * 1024 * 1024, vmem_need)))
    # TODO(synk): tile the class axis as well if C is so large that even a
    # (C, 8, 128) double-buffered slab pair exceeds the per-generation budget.

    grid = (N, GH, GW)
    kernel = functools.partial(
        _ce_kernel, num_classes=C, row_chunk=row_chunk, h=h, w=w,
        ignore_label=ignore_label,
        need_row_mask=need_row_mask, need_col_mask=need_col_mask)

    partial_sums = pl.pallas_call(
        kernel,
        out_shape=jax.ShapeDtypeStruct((N * GH * GW, 1, 1), jnp.float32),
        grid=grid,
        in_specs=[
            # logits, native NCHW: lane axis = W, sublane axis = H
            pl.BlockSpec((1, C, TH, TW), lambda n, hb, wb: (n, 0, hb, wb)),
            # labels, lane-dense
            pl.BlockSpec((1, TH, TW), lambda n, hb, wb: (n, hb, wb)),
        ],
        out_specs=pl.BlockSpec(
            (1, 1, 1), lambda n, hb, wb: (n * GH * GW + hb * GW + wb, 0, 0)),
        compiler_params=pltpu.CompilerParams(
            dimension_semantics=("parallel", "parallel", "parallel"),
            vmem_limit_bytes=vmem_limit),
    )(score, labels)

    # Valid-pixel count is cheap on the tiny labels tensor; keep it out of the
    # kernel.  Mean over non-ignored pixels; 0/0 = NaN if everything is
    # ignored, matching PyTorch.
    valid_count = jnp.sum((target != ignore_label).astype(jnp.float32))
    return jnp.sum(partial_sums) / valid_count


def _reference(score, target, ignore_label=-1):
    N, C, ph, pw = score.shape
    _, h, w = target.shape
    if (ph, pw) != (h, w):
        score = jax.image.resize(score, (N, C, h, w), method="bilinear",
                                 antialias=False)
    logits = jnp.transpose(score, (0, 2, 3, 1)).reshape(-1, C).astype(jnp.float32)
    labels = target.reshape(-1)
    valid = labels != ignore_label
    lse = jax.scipy.special.logsumexp(logits, axis=-1)
    picked = jnp.take_along_axis(
        logits, jnp.clip(labels, 0, C - 1)[:, None], axis=-1)[:, 0]
    loss = jnp.where(valid, lse - picked, 0.0)
    return loss.sum() / valid.sum()


if __name__ == "__main__":
    key = jax.random.PRNGKey(0)
    k1, k2 = jax.random.split(key)

    # score is lower resolution than target -> exercises the bilinear-upsample branch
    score = jax.random.normal(k1, (2, 8, 8, 8), dtype=jnp.float32)         # (N, C, H', W')
    target = jax.random.randint(k2, (2, 16, 16), -1, 8).astype(jnp.int32)  # (N, H, W), -1 = ignore

    loss = jax.block_until_ready(cross_entropy(score, target, ignore_label=-1))
    ref = jax.block_until_ready(_reference(score, target, ignore_label=-1))
    assert abs(float(loss) - float(ref)) < 1e-3, (float(loss), float(ref))

    print("KERNEL_OK")
</pallas_src>

<mosaic_0001>
module attributes {stable_mosaic.version = 11 : i64} {
  func.func @_ce_kernel(%arg0: i32, %arg1: i32, %arg2: i32, %arg3: memref<1x8x8x16xf32, #tpu.memory_space<vmem>>, %arg4: memref<1x8x16xi32, #tpu.memory_space<vmem>>, %arg5: memref<1x1x1xf32, #tpu.memory_space<vmem>>) attributes {dimension_semantics = [#tpu.dimension_semantics<parallel>, #tpu.dimension_semantics<parallel>, #tpu.dimension_semantics<parallel>], iteration_bounds = array<i64: 2, 2, 1>, scalar_prefetch = 0 : i64, scratch_operands = 0 : i64, tpu.core_type = #tpu.core_type<tc>, window_params = [{transform_indices = @transform_0, window_bounds = array<i64: 1, 8, 8, 16>}, {transform_indices = @transform_1, window_bounds = array<i64: 1, 8, 16>}, {transform_indices = @transform_2, window_bounds = array<i64: 1, 1, 1>}]} {
    %cst = arith.constant 0.000000e+00 : f32
    %0 = vector.broadcast %cst : f32 to vector<8x16xf32>
    %c0 = arith.constant 0 : index
    %c0_0 = arith.constant 0 : index
    %c0_1 = arith.constant 0 : index
    %1 = vector.load %arg4[%c0, %c0_0, %c0_1] : memref<1x8x16xi32, #tpu.memory_space<vmem>>, vector<1x8x16xi32>
    %2 = vector.shape_cast %1 : vector<1x8x16xi32> to vector<8x16xi32>
    %c0_2 = arith.constant 0 : index
    %c0_3 = arith.constant 0 : index
    %c0_4 = arith.constant 0 : index
    %c0_5 = arith.constant 0 : index
    %3 = vector.load %arg3[%c0_2, %c0_3, %c0_4, %c0_5] : memref<1x8x8x16xf32, #tpu.memory_space<vmem>>, vector<1x1x8x16xf32>
    %4 = vector.shape_cast %3 : vector<1x1x8x16xf32> to vector<8x16xf32>
    %c0_6 = arith.constant 0 : index
    %c1 = arith.constant 1 : index
    %c0_7 = arith.constant 0 : index
    %c0_8 = arith.constant 0 : index
    %5 = vector.load %arg3[%c0_6, %c1, %c0_7, %c0_8] : memref<1x8x8x16xf32, #tpu.memory_space<vmem>>, vector<1x1x8x16xf32>
    %6 = vector.shape_cast %5 : vector<1x1x8x16xf32> to vector<8x16xf32>
    %7 = arith.maximumf %4, %6 : vector<8x16xf32>
    %c0_9 = arith.constant 0 : index
    %c2 = arith.constant 2 : index
    %c0_10 = arith.constant 0 : index
    %c0_11 = arith.constant 0 : index
    %8 = vector.load %arg3[%c0_9, %c2, %c0_10, %c0_11] : memref<1x8x8x16xf32, #tpu.memory_space<vmem>>, vector<1x1x8x16xf32>
    %9 = vector.shape_cast %8 : vector<1x1x8x16xf32> to vector<8x16xf32>
    %10 = arith.maximumf %7, %9 : vector<8x16xf32>
    %c0_12 = arith.constant 0 : index
    %c3 = arith.constant 3 : index
    %c0_13 = arith.constant 0 : index
    %c0_14 = arith.constant 0 : index
    %11 = vector.load %arg3[%c0_12, %c3, %c0_13, %c0_14] : memref<1x8x8x16xf32, #tpu.memory_space<vmem>>, vector<1x1x8x16xf32>
    %12 = vector.shape_cast %11 : vector<1x1x8x16xf32> to vector<8x16xf32>
    %13 = arith.maximumf %10, %12 : vector<8x16xf32>
    %c0_15 = arith.constant 0 : index
    %c4 = arith.constant 4 : index
    %c0_16 = arith.constant 0 : index
    %c0_17 = arith.constant 0 : index
    %14 = vector.load %arg3[%c0_15, %c4, %c0_16, %c0_17] : memref<1x8x8x16xf32, #tpu.memory_space<vmem>>, vector<1x1x8x16xf32>
    %15 = vector.shape_cast %14 : vector<1x1x8x16xf32> to vector<8x16xf32>
    %16 = arith.maximumf %13, %15 : vector<8x16xf32>
    %c0_18 = arith.constant 0 : index
    %c5 = arith.constant 5 : index
    %c0_19 = arith.constant 0 : index
    %c0_20 = arith.constant 0 : index
    %17 = vector.load %arg3[%c0_18, %c5, %c0_19, %c0_20] : memref<1x8x8x16xf32, #tpu.memory_space<vmem>>, vector<1x1x8x16xf32>
    %18 = vector.shape_cast %17 : vector<1x1x8x16xf32> to vector<8x16xf32>
    %19 = arith.maximumf %16, %18 : vector<8x16xf32>
    %c0_21 = arith.constant 0 : index
    %c6 = arith.constant 6 : index
    %c0_22 = arith.constant 0 : index
    %c0_23 = arith.constant 0 : index
    %20 = vector.load %arg3[%c0_21, %c6, %c0_22, %c0_23] : memref<1x8x8x16xf32, #tpu.memory_space<vmem>>, vector<1x1x8x16xf32>
    %21 = vector.shape_cast %20 : vector<1x1x8x16xf32> to vector<8x16xf32>
    %22 = arith.maximumf %19, %21 : vector<8x16xf32>
    %c0_24 = arith.constant 0 : index
    %c7 = arith.constant 7 : index
    %c0_25 = arith.constant 0 : index
    %c0_26 = arith.constant 0 : index
    %23 = vector.load %arg3[%c0_24, %c7, %c0_25, %c0_26] : memref<1x8x8x16xf32, #tpu.memory_space<vmem>>, vector<1x1x8x16xf32>
    %24 = vector.shape_cast %23 : vector<1x1x8x16xf32> to vector<8x16xf32>
    %25 = arith.maximumf %22, %24 : vector<8x16xf32>
    %cst_27 = arith.constant 0.000000e+00 : f32
    %26 = vector.broadcast %cst_27 : f32 to vector<8x16xf32>
    %cst_28 = arith.constant 0.000000e+00 : f32
    %27 = vector.broadcast %cst_28 : f32 to vector<8x16xf32>
    %c0_29 = arith.constant 0 : index
    %c0_30 = arith.constant 0 : index
    %c0_31 = arith.constant 0 : index
    %c0_32 = arith.constant 0 : index
    %28 = vector.load %arg3[%c0_29, %c0_30, %c0_31, %c0_32] : memref<1x8x8x16xf32, #tpu.memory_space<vmem>>, vector<1x1x8x16xf32>
    %29 = vector.shape_cast %28 : vector<1x1x8x16xf32> to vector<8x16xf32>
    %30 = arith.subf %29, %25 : vector<8x16xf32>
    %31 = math.exp %30 : vector<8x16xf32>
    %32 = arith.addf %26, %31 : vector<8x16xf32>
    %c0_i32 = arith.constant 0 : i32
    %33 = vector.broadcast %c0_i32 : i32 to vector<8x16xi32>
    %34 = arith.cmpi eq, %2, %33 : vector<8x16xi32>
    %cst_33 = arith.constant 0.000000e+00 : f32
    %35 = vector.broadcast %cst_33 : f32 to vector<8x16xf32>
    %36 = arith.select %34, %30, %35 : vector<8x16xi1>, vector<8x16xf32>
    %37 = arith.addf %27, %36 : vector<8x16xf32>
    %c0_34 = arith.constant 0 : index
    %c1_35 = arith.constant 1 : index
    %c0_36 = arith.constant 0 : index
    %c0_37 = arith.constant 0 : index
    %38 = vector.load %arg3[%c0_34, %c1_35, %c0_36, %c0_37] : memref<1x8x8x16xf32, #tpu.memory_space<vmem>>, vector<1x1x8x16xf32>
    %39 = vector.shape_cast %38 : vector<1x1x8x16xf32> to vector<8x16xf32>
    %40 = arith.subf %39, %25 : vector<8x16xf32>
    %41 = math.exp %40 : vector<8x16xf32>
    %42 = arith.addf %32, %41 : vector<8x16xf32>
    %c1_i32 = arith.constant 1 : i32
    %43 = vector.broadcast %c1_i32 : i32 to vector<8x16xi32>
    %44 = arith.cmpi eq, %2, %43 : vector<8x16xi32>
    %cst_38 = arith.constant 0.000000e+00 : f32
    %45 = vector.broadcast %cst_38 : f32 to vector<8x16xf32>
    %46 = arith.select %44, %40, %45 : vector<8x16xi1>, vector<8x16xf32>
    %47 = arith.addf %37, %46 : vector<8x16xf32>
    %c0_39 = arith.constant 0 : index
    %c2_40 = arith.constant 2 : index
    %c0_41 = arith.constant 0 : index
    %c0_42 = arith.constant 0 : index
    %48 = vector.load %arg3[%c0_39, %c2_40, %c0_41, %c0_42] : memref<1x8x8x16xf32, #tpu.memory_space<vmem>>, vector<1x1x8x16xf32>
    %49 = vector.shape_cast %48 : vector<1x1x8x16xf32> to vector<8x16xf32>
    %50 = arith.subf %49, %25 : vector<8x16xf32>
    %51 = math.exp %50 : vector<8x16xf32>
    %52 = arith.addf %42, %51 : vector<8x16xf32>
    %c2_i32 = arith.constant 2 : i32
    %53 = vector.broadcast %c2_i32 : i32 to vector<8x16xi32>
    %54 = arith.cmpi eq, %2, %53 : vector<8x16xi32>
    %cst_43 = arith.constant 0.000000e+00 : f32
    %55 = vector.broadcast %cst_43 : f32 to vector<8x16xf32>
    %56 = arith.select %54, %50, %55 : vector<8x16xi1>, vector<8x16xf32>
    %57 = arith.addf %47, %56 : vector<8x16xf32>
    %c0_44 = arith.constant 0 : index
    %c3_45 = arith.constant 3 : index
    %c0_46 = arith.constant 0 : index
    %c0_47 = arith.constant 0 : index
    %58 = vector.load %arg3[%c0_44, %c3_45, %c0_46, %c0_47] : memref<1x8x8x16xf32, #tpu.memory_space<vmem>>, vector<1x1x8x16xf32>
    %59 = vector.shape_cast %58 : vector<1x1x8x16xf32> to vector<8x16xf32>
    %60 = arith.subf %59, %25 : vector<8x16xf32>
    %61 = math.exp %60 : vector<8x16xf32>
    %62 = arith.addf %52, %61 : vector<8x16xf32>
    %c3_i32 = arith.constant 3 : i32
    %63 = vector.broadcast %c3_i32 : i32 to vector<8x16xi32>
    %64 = arith.cmpi eq, %2, %63 : vector<8x16xi32>
    %cst_48 = arith.constant 0.000000e+00 : f32
    %65 = vector.broadcast %cst_48 : f32 to vector<8x16xf32>
    %66 = arith.select %64, %60, %65 : vector<8x16xi1>, vector<8x16xf32>
    %67 = arith.addf %57, %66 : vector<8x16xf32>
    %c0_49 = arith.constant 0 : index
    %c4_50 = arith.constant 4 : index
    %c0_51 = arith.constant 0 : index
    %c0_52 = arith.constant 0 : index
    %68 = vector.load %arg3[%c0_49, %c4_50, %c0_51, %c0_52] : memref<1x8x8x16xf32, #tpu.memory_space<vmem>>, vector<1x1x8x16xf32>
    %69 = vector.shape_cast %68 : vector<1x1x8x16xf32> to vector<8x16xf32>
    %70 = arith.subf %69, %25 : vector<8x16xf32>
    %71 = math.exp %70 : vector<8x16xf32>
    %72 = arith.addf %62, %71 : vector<8x16xf32>
    %c4_i32 = arith.constant 4 : i32
    %73 = vector.broadcast %c4_i32 : i32 to vector<8x16xi32>
    %74 = arith.cmpi eq, %2, %73 : vector<8x16xi32>
    %cst_53 = arith.constant 0.000000e+00 : f32
    %75 = vector.broadcast %cst_53 : f32 to vector<8x16xf32>
    %76 = arith.select %74, %70, %75 : vector<8x16xi1>, vector<8x16xf32>
    %77 = arith.addf %67, %76 : vector<8x16xf32>
    %c0_54 = arith.constant 0 : index
    %c5_55 = arith.constant 5 : index
    %c0_56 = arith.constant 0 : index
    %c0_57 = arith.constant 0 : index
    %78 = vector.load %arg3[%c0_54, %c5_55, %c0_56, %c0_57] : memref<1x8x8x16xf32, #tpu.memory_space<vmem>>, vector<1x1x8x16xf32>
    %79 = vector.shape_cast %78 : vector<1x1x8x16xf32> to vector<8x16xf32>
    %80 = arith.subf %79, %25 : vector<8x16xf32>
    %81 = math.exp %80 : vector<8x16xf32>
    %82 = arith.addf %72, %81 : vector<8x16xf32>
    %c5_i32 = arith.constant 5 : i32
    %83 = vector.broadcast %c5_i32 : i32 to vector<8x16xi32>
    %84 = arith.cmpi eq, %2, %83 : vector<8x16xi32>
    %cst_58 = arith.constant 0.000000e+00 : f32
    %85 = vector.broadcast %cst_58 : f32 to vector<8x16xf32>
    %86 = arith.select %84, %80, %85 : vector<8x16xi1>, vector<8x16xf32>
    %87 = arith.addf %77, %86 : vector<8x16xf32>
    %c0_59 = arith.constant 0 : index
    %c6_60 = arith.constant 6 : index
    %c0_61 = arith.constant 0 : index
    %c0_62 = arith.constant 0 : index
    %88 = vector.load %arg3[%c0_59, %c6_60, %c0_61, %c0_62] : memref<1x8x8x16xf32, #tpu.memory_space<vmem>>, vector<1x1x8x16xf32>
    %89 = vector.shape_cast %88 : vector<1x1x8x16xf32> to vector<8x16xf32>
    %90 = arith.subf %89, %25 : vector<8x16xf32>
    %91 = math.exp %90 : vector<8x16xf32>
    %92 = arith.addf %82, %91 : vector<8x16xf32>
    %c6_i32 = arith.constant 6 : i32
    %93 = vector.broadcast %c6_i32 : i32 to vector<8x16xi32>
    %94 = arith.cmpi eq, %2, %93 : vector<8x16xi32>
    %cst_63 = arith.constant 0.000000e+00 : f32
    %95 = vector.broadcast %cst_63 : f32 to vector<8x16xf32>
    %96 = arith.select %94, %90, %95 : vector<8x16xi1>, vector<8x16xf32>
    %97 = arith.addf %87, %96 : vector<8x16xf32>
    %c0_64 = arith.constant 0 : index
    %c7_65 = arith.constant 7 : index
    %c0_66 = arith.constant 0 : index
    %c0_67 = arith.constant 0 : index
    %98 = vector.load %arg3[%c0_64, %c7_65, %c0_66, %c0_67] : memref<1x8x8x16xf32, #tpu.memory_space<vmem>>, vector<1x1x8x16xf32>
    %99 = vector.shape_cast %98 : vector<1x1x8x16xf32> to vector<8x16xf32>
    %100 = arith.subf %99, %25 : vector<8x16xf32>
    %101 = math.exp %100 : vector<8x16xf32>
    %102 = arith.addf %92, %101 : vector<8x16xf32>
    %c7_i32 = arith.constant 7 : i32
    %103 = vector.broadcast %c7_i32 : i32 to vector<8x16xi32>
    %104 = arith.cmpi eq, %2, %103 : vector<8x16xi32>
    %cst_68 = arith.constant 0.000000e+00 : f32
    %105 = vector.broadcast %cst_68 : f32 to vector<8x16xf32>
    %106 = arith.select %104, %100, %105 : vector<8x16xi1>, vector<8x16xf32>
    %107 = arith.addf %97, %106 : vector<8x16xf32>
    %c-1_i32 = arith.constant -1 : i32
    %108 = vector.broadcast %c-1_i32 : i32 to vector<8x16xi32>
    %109 = arith.cmpi ne, %2, %108 : vector<8x16xi32>
    %110 = math.log %102 : vector<8x16xf32>
    %111 = arith.subf %110, %107 : vector<8x16xf32>
    %cst_69 = arith.constant 0.000000e+00 : f32
    %112 = vector.broadcast %cst_69 : f32 to vector<8x16xf32>
    %113 = arith.select %109, %111, %112 : vector<8x16xi1>, vector<8x16xf32>
    %114 = arith.addf %0, %113 : vector<8x16xf32>
    %115 = vector.shape_cast %114 : vector<8x16xf32> to vector<1x8x16xf32>
    %cst_70 = arith.constant dense<0.000000e+00> : vector<1xf32>
    %116 = vector.multi_reduction <add>, %115, %cst_70 [1, 2] : vector<1x8x16xf32> to vector<1xf32>
    %117 = vector.shape_cast %116 : vector<1xf32> to vector<1x1x1xf32>
    %118 = vector.extract %117[0, 0, 0] : f32 from vector<1x1x1xf32>
    %119 = vector.broadcast %118 : f32 to vector<1x1xf32>
    %c0_71 = arith.constant 0 : index
    %c0_72 = arith.constant 0 : index
    %c0_73 = arith.constant 0 : index
    %120 = vector.load %arg5[%c0_71, %c0_72, %c0_73] : memref<1x1x1xf32, #tpu.memory_space<vmem>>, vector<1x1x1xf32>
    %121 = vector.shape_cast %120 : vector<1x1x1xf32> to vector<1x1xf32>
    %122 = vector.shape_cast %119 : vector<1x1xf32> to vector<1x1x1xf32>
    tpu.vector_store %arg5[%c0_71, %c0_72, %c0_73], %122 {strides = array<i32>} : memref<1x1x1xf32, #tpu.memory_space<vmem>>, vector<1x1x1xf32>,
    return
  }
  func.func @transform_0(%arg0: i32, %arg1: i32, %arg2: i32) -> (i32, i32, i32, i32) {
    %c0_i32 = arith.constant 0 : i32
    %c0_i32_0 = arith.constant 0 : i32
    return %arg0, %c0_i32, %arg1, %arg2 : i32, i32, i32, i32
  }
  func.func @transform_1(%arg0: i32, %arg1: i32, %arg2: i32) -> (i32, i32, i32) {
    %c0_i32 = arith.constant 0 : i32
    return %arg0, %arg1, %arg2 : i32, i32, i32
  }
  func.func @transform_2(%arg0: i32, %arg1: i32, %arg2: i32) -> (i32, i32, i32) {
    %c2_i32 = arith.constant 2 : i32
    %0 = arith.muli %arg0, %c2_i32 : i32
    %c1_i32 = arith.constant 1 : i32
    %1 = arith.muli %0, %c1_i32 : i32
    %c1_i32_0 = arith.constant 1 : i32
    %2 = arith.muli %arg1, %c1_i32_0 : i32
    %3 = arith.addi %1, %2 : i32
    %4 = arith.addi %3, %arg2 : i32
    %c0_i32 = arith.constant 0 : i32
    %c0_i32_1 = arith.constant 0 : i32
    %c0_i32_2 = arith.constant 0 : i32
    return %4, %c0_i32, %c0_i32_1 : i32, i32, i32
  }
}

</mosaic_0001>

<llo_original>
// kernel: tpu_custom_call.1
$region0: #{tpu_custom_call.1}
  #allocation0 [shape = 'u32[]', space=smem, size = 0x4, offset = 0x4, fixed_abs, tag = 'smem constant byte address 0x4 - core index']
  #allocation1 [shape = 'u32[144,128]{1,0:T(1,128)}', space=vmem, size = 0x12000, scoped, tag = 'internal scratch']
  %s0 = inlined_call_operand.hbm [shape: f32[2,8,16,16], index: 0, kind: input, shape index: {}]
  %s1 = inlined_call_operand.hbm [shape: s32[2,16,16], index: 1, kind: input, shape index: {}]
  %s2 = inlined_call_operand.vmem [shape: f32[4,1,1], index: 2, kind: output, shape index: {}]
  %s3 = sld [smem:[#allocation0]]
  $region49: #{tpu_custom_call.1} parent=0
    _
  %s5 = ssub.s32 1, %s3
  %s6 = scalar_select 0, %s5, %s3
  $region1: #{tpu_custom_call.1} parent=0
    #allocation2 [shape = 'u8[65536]{0}', space=vmem, size = 0x10000, scoped, tag = 'input window, operand 0']
    #allocation3 [shape = 's32[2]{0}', space=sflag, size = 0x8, scoped, tag = 'scoped memory for tpu_custom_call.1']
    #allocation4 [shape = 'u8[8192]{0}', space=vmem, size = 0x2000, scoped, tag = 'input window, operand 1']
    #allocation5 [shape = 's32[2]{0}', space=sflag, size = 0x8, scoped, tag = 'scoped memory for tpu_custom_call.1']
    %7 = vsyncpa [#allocation3], 0
    %s8 = scalar_lea.sflag [#allocation3], 1
    %9 = vsyncpa %s8, 0
    %10 = vsyncpa [#allocation5], 0
    %s11 = scalar_lea.sflag [#allocation5], 1
    %12 = vsyncpa %s11, 0
    loop: start=0, step=1, limit=6
    $region2: #{tpu_custom_call.1} parent=1 // loop_pre_header
      _
    $region3: #{tpu_custom_call.1} parent=1 // loop_header
      %s14 = sphi 0, %s18
      %p15 = scmp.ge.s32.totalorder %s14, 6
      %s21 = sphi 0, %s40
      %s22 = sphi 0, %s36
      %s23 = sphi 0, %s32
      %s24 = sphi 0, %s21
      %s25 = sphi 0, %s22
      %s26 = sphi 0, %s23
      %s27 = sphi 0, %s24
      %s28 = sphi 0, %s25
      %s29 = sphi 0, %s26
      %s47 = sphi 0, %s49
      %s50 = sphi 0, %s47
      %s51 = sphi 0, %s50
      %s67 = sphi 0, %s51
      %s77 = sphi 0, %s79
      %s80 = sphi 0, %s77
      %s81 = sphi 0, %s80
      %s97 = sphi 0, %s81
      %s109 = sphi 0, %s111
      %s112 = sphi 0, %s109
      %s113 = sphi 0, %s112
      %s129 = sphi 0, %s113
    $region4: #{tpu_custom_call.1} parent=1 // loop_header_branch
      %17 = sbr.rel (%p15) target = $region8
    $region5: #{tpu_custom_call.1} parent=1 // loop_body
      %s19 = ssub.s32 %s14, 1
      %s20 = ssub.s32 %s14, 2
      %s30 = sadd.s32 1, %s23
      %p31 = scmp.ge.s32.totalorder %s30, 1
      %s32 = scalar_select %p31, 0, %s30
      %s33 = sadd.s32 1, %s22
      %s34 = scalar_select %p31, %s33, %s22
      %p35 = scmp.ge.s32.totalorder %s34, 2
      %s36 = scalar_select %p35, 0, %s34
      %s37 = sadd.s32 1, %s21
      %s38 = scalar_select %p35, %s37, %s21
      %p39 = scmp.ge.s32.totalorder %s38, 2
      %s40 = scalar_select %p39, 0, %s38
      %s41 = ssub.s32 %s21, %s40
      %s42 = ssub.s32 %s22, %s36
      %s43 = sor.u32 %s41, %s42
      %s44 = ssub.s32 %s23, %s32
      %s45 = sor.u32 %s43, %s44
      %p46 = scmp.eq.s32.totalorder %s45, 0
      %s48 = sadd.s32 %s47, 1
      %s49 = scalar_select %p46, %s47, %s48
      %p52 = pneg %p46
      %p53 = scmp.eq.s32.totalorder %s14, 3
      %p54 = por %p52, %p53
      %p55 = scmp.ne.s32.totalorder %s47, %s50
      %p56 = scmp.eq.s32.totalorder %s14, 0
      %p57 = por %p55, %p56
      %p58 = scmp.ne.s32.totalorder %s47, %s50
      %p59 = scmp.eq.s32.totalorder %s19, 3
      %p60 = por %p58, %p59
      %p61 = scmp.ne.s32.totalorder %s50, %s51
      %p62 = scmp.eq.s32.totalorder %s19, 0
      %p63 = por %p61, %p62
      %p64 = scmp.ne.s32.totalorder %s50, %s51
      %p65 = scmp.eq.s32.totalorder %s20, 3
      %p66 = por %p64, %p65
      %p68 = scmp.ne.s32.totalorder %s51, %s67
      %p69 = scmp.eq.s32.totalorder %s20, 0
      %p70 = por %p68, %p69
      %s71 = ssub.s32 %s21, %s40
      %s72 = ssub.s32 %s22, %s36
      %s73 = sor.u32 %s71, %s72
      %s74 = ssub.s32 %s23, %s32
      %s75 = sor.u32 %s73, %s74
      %p76 = scmp.eq.s32.totalorder %s75, 0
      %s78 = sadd.s32 %s77, 1
      %s79 = scalar_select %p76, %s77, %s78
      %p82 = pneg %p76
      %p83 = scmp.eq.s32.totalorder %s14, 3
      %p84 = por %p82, %p83
      %p85 = scmp.ne.s32.totalorder %s77, %s80
      %p86 = scmp.eq.s32.totalorder %s14, 0
      %p87 = por %p85, %p86
      %p88 = scmp.ne.s32.totalorder %s77, %s80
      %p89 = scmp.eq.s32.totalorder %s19, 3
      %p90 = por %p88, %p89
      %p91 = scmp.ne.s32.totalorder %s80, %s81
      %p92 = scmp.eq.s32.totalorder %s19, 0
      %p93 = por %p91, %p92
      %p94 = scmp.ne.s32.totalorder %s80, %s81
      %p95 = scmp.eq.s32.totalorder %s20, 3
      %p96 = por %p94, %p95
      %p98 = scmp.ne.s32.totalorder %s81, %s97
      %p99 = scmp.eq.s32.totalorder %s20, 0
      %p100 = por %p98, %p99
      %s101 = smul.u32 %s21, 2
      %s102 = sadd.s32 %s101, %s22
      %s103 = sadd.s32 %s102, %s23
      %s104 = smul.u32 %s40, 2
      %s105 = sadd.s32 %s104, %s36
      %s106 = sadd.s32 %s105, %s32
      %s107 = ssub.s32 %s103, %s106
      %p108 = scmp.eq.s32.totalorder %s107, 0
      %s110 = sadd.s32 %s109, 1
      %s111 = scalar_select %p108, %s109, %s110
      %p114 = pneg %p108
      %p115 = scmp.eq.s32.totalorder %s14, 3
      %p116 = por %p114, %p115
      %p117 = scmp.ne.s32.totalorder %s109, %s112
      %p118 = scmp.eq.s32.totalorder %s14, 0
      %p119 = por %p117, %p118
      %p120 = scmp.ne.s32.totalorder %s109, %s112
      %p121 = scmp.eq.s32.totalorder %s19, 3
      %p122 = por %p120, %p121
      %p123 = scmp.ne.s32.totalorder %s112, %s113
      %p124 = scmp.eq.s32.totalorder %s19, 0
      %p125 = por %p123, %p124
      %p126 = scmp.ne.s32.totalorder %s112, %s113
      %p127 = scmp.eq.s32.totalorder %s20, 3
      %p128 = por %p126, %p127
      %p130 = scmp.ne.s32.totalorder %s113, %s129
      %p131 = scmp.eq.s32.totalorder %s20, 0
      %p132 = por %p130, %p131
      %p133 = scmp.le.s32.totalorder 1, %s14
      %p134 = scmp.lt.s32.totalorder %s14, 5
      %p135 = pnand %p133, %p134
      %p136 = pneg %p135
      // Predicated region
      $region9: #{tpu_custom_call.1} parent=5 // pred_check
        _
      $region10: #{tpu_custom_call.1} parent=5 // pred_check_branch
        %138 = sbr.rel (%p135) target = $region12
      $region11: #{tpu_custom_call.1} parent=5 // pred_region
        %s139 = ssub.s32 %s14, 1
      $region12: #{tpu_custom_call.1} parent=5 // pred_fallthru
        _
      %p140 = scmp.lt.s32.totalorder %s14, 4
      // Predicated region
      $region13: #{tpu_custom_call.1} parent=5 // pred_check
        %p141 = pneg %p140
      $region14: #{tpu_custom_call.1} parent=5 // pred_check_branch
        %143 = sbr.rel (%p141) target = $region16
      $region15: #{tpu_custom_call.1} parent=5 // pred_region
        // Predicated region
        $region17: #{tpu_custom_call.1} parent=15 // pred_check
          %p144 = pneg %p57
        $region18: #{tpu_custom_call.1} parent=15 // pred_check_branch
          %146 = sbr.rel (%p144) target = $region20
        $region19: #{tpu_custom_call.1} parent=15 // pred_region
          %s147 = sand.u32 %s47, 1
          %s148 = scalar_lea.sflag [#allocation3], %s147
          %s149 = sand.u32 %s47, 1
          %s150 = smul.addr %s149, 64
          %s151 = scalar_lea.vmem [#allocation2], %s150
          %s153 = ssub.s32 1024, 1024
          %154 = vsyncadd %s148, %s153
          %s155 = sadd.s32 %s23, %s22
          %s156 = smul.addr %s21, 16
          %s157 = sadd.s32 %s155, %s156
          %s158 = smul.addr %s157, 128
          %s159 = scalar_lea.hbm %s0, %s158
          %s160 = sshll.u32 %s151, 4
          %s161 = int_to_ptr.vmem [resolvable:$true] %s160
          %166 = dma.hbm_to_vmem [thread:$0]  %s159, 1024, %s161, %s148, 256, 128, 8
        $region20: #{tpu_custom_call.1} parent=15 // pred_fallthru
          _
        // Predicated region
        $region21: #{tpu_custom_call.1} parent=15 // pred_check
          %p167 = pneg %p87
        $region22: #{tpu_custom_call.1} parent=15 // pred_check_branch
          %169 = sbr.rel (%p167) target = $region24
        $region23: #{tpu_custom_call.1} parent=15 // pred_region
          %s170 = sand.u32 %s77, 1
          %s171 = scalar_lea.sflag [#allocation5], %s170
          %s172 = sand.u32 %s77, 1
          %s173 = smul.addr %s172, 8
          %s174 = scalar_lea.vmem [#allocation4], %s173
          %s176 = ssub.s32 128, 128
          %177 = vsyncadd %s171, %s176
          %s178 = sadd.s32 %s23, %s22
          %s179 = smul.addr %s21, 2
          %s180 = sadd.s32 %s178, %s179
          %s181 = smul.addr %s180, 128
          %s182 = scalar_lea.hbm %s1, %s181
          %s184 = sshll.u32 %s174, 4
          %s185 = int_to_ptr.vmem [resolvable:$true] %s184
          %187 = dma.hbm_to_vmem [thread:$0]  %s182, 128, %s185, %s171
        $region24: #{tpu_custom_call.1} parent=15 // pred_fallthru
          _
      $region16: #{tpu_custom_call.1} parent=5 // pred_fallthru
        _
      %p188 = scmp.le.s32.totalorder 1, %s14
      %p189 = scmp.lt.s32.totalorder %s14, 5
      %p190 = pnand %p188, %p189
      %p191 = pneg %p190
      // Predicated region
      $region25: #{tpu_custom_call.1} parent=5 // pred_check
        _
      $region26: #{tpu_custom_call.1} parent=5 // pred_check_branch
        %193 = sbr.rel (%p190) target = $region28
      $region27: #{tpu_custom_call.1} parent=5 // pred_region
        %s194 = ssub.s32 %s14, 1
        %s195 = sand.u32 %s50, 1
        %s196 = scalar_lea.sflag [#allocation3], %s195
        %s197 = sand.u32 %s50, 1
        %s198 = smul.addr %s197, 64
        %s199 = scalar_lea.vmem [#allocation2], %s198
        // Predicated region
        $region29: #{tpu_custom_call.1} parent=27 // pred_check
          %p200 = pneg %p63
        $region30: #{tpu_custom_call.1} parent=27 // pred_check_branch
          %202 = sbr.rel (%p200) target = $region32
        $region31: #{tpu_custom_call.1} parent=27 // pred_region
          %203 = dma.done %s196, 1024
        $region32: #{tpu_custom_call.1} parent=27 // pred_fallthru
          _
        %s204 = sand.u32 %s80, 1
        %s205 = scalar_lea.sflag [#allocation5], %s204
        %s206 = sand.u32 %s80, 1
        %s207 = smul.addr %s206, 8
        %s208 = scalar_lea.vmem [#allocation4], %s207
        // Predicated region
        $region33: #{tpu_custom_call.1} parent=27 // pred_check
          %p209 = pneg %p93
        $region34: #{tpu_custom_call.1} parent=27 // pred_check_branch
          %211 = sbr.rel (%p209) target = $region36
        $region35: #{tpu_custom_call.1} parent=27 // pred_region
          %212 = dma.done %s205, 128
        $region36: #{tpu_custom_call.1} parent=27 // pred_fallthru
          _
        %s213 = sand.u32 %s50, 1
        %s214 = scalar_lea.sflag [#allocation3], %s213
        %s215 = sand.u32 %s50, 1
        %s216 = smul.addr %s215, 64
        %s217 = scalar_lea.vmem [#allocation2], %s216
        %p218 = pneg %p63
        %p219 = pneg %p60
        %s220 = sand.u32 %s80, 1
        %s221 = scalar_lea.sflag [#allocation5], %s220
        %s222 = sand.u32 %s80, 1
        %s223 = smul.addr %s222, 8
        %s224 = scalar_lea.vmem [#allocation4], %s223
        %p225 = pneg %p93
        %p226 = pneg %p90
        %p227 = pneg %p125
        %p228 = pneg %p122
        %s229 = smul.u32 %s24, 2
        %s230 = sadd.s32 %s229, %s25
        %s231 = sadd.s32 %s230, %s26
        %p232 = scmp.lt.s32.totalorder %s231, 3
        %s233 = scalar_select %p232, %s231, 3
        %s234 = scalar_lea.vmem %s2, %s233
        %s235 = smul.u32 %s24, 2
        %s236 = sadd.s32 %s235, %s25
        %s237 = sadd.s32 %s236, %s26
        %p238 = scmp.lt.s32.totalorder %s237, 3
        %s239 = scalar_select %p238, %s237, 3
        %s240 = scalar_lea.vmem %s2, %s239
        %s241 = smul.u32 %s24, 2
        %s242 = sadd.s32 %s241, %s25
        %s243 = sadd.s32 %s242, %s26
        %v244 = vld [vmem:[%s208] sm:$0xff]
        %v245 = vld [vmem:[%s199] sm:$0xff]
        %s246 = scalar_lea.vmem %s199, 8 [#allocation2]
        %v247 = vld [vmem:[%s246] sm:$0xff]
        %v248 = vmax.f32 %v245, %v247
        %s249 = scalar_lea.vmem %s199, 16 [#allocation2]
        %v250 = vld [vmem:[%s249] sm:$0xff]
        %v251 = vmax.f32 %v248, %v250
        %s252 = scalar_lea.vmem %s199, 24 [#allocation2]
        %v253 = vld [vmem:[%s252] sm:$0xff]
        %v254 = vmax.f32 %v251, %v253
        %s255 = scalar_lea.vmem %s199, 32 [#allocation2]
        %v256 = vld [vmem:[%s255] sm:$0xff]
        %v257 = vmax.f32 %v254, %v256
        %s258 = scalar_lea.vmem %s199, 40 [#allocation2]
        %v259 = vld [vmem:[%s258] sm:$0xff]
        %v260 = vmax.f32 %v257, %v259
        %s261 = scalar_lea.vmem %s199, 48 [#allocation2]
        %v262 = vld [vmem:[%s261] sm:$0xff]
        %v263 = vmax.f32 %v260, %v262
        %s264 = scalar_lea.vmem %s199, 56 [#allocation2]
        %v265 = vld [vmem:[%s264] sm:$0xff]
        %v266 = vmax.f32 %v263, %v265
        %v267 = vsub.f32 %v245, %v266
        %v268 = vmul.f32 %v267, 1.442695
        %v269 = vpow.pop %v268
        %v270 = vadd.f32 %v269, 0.0
        %vm271 = vcmp.eq.s32.totalorder %v244, 0
        %v272 = vsel %vm271, %v267, 0.0
        %v273 = vadd.f32 %v272, 0.0
        %v274 = vsub.f32 %v247, %v266
        %v275 = vmul.f32 %v274, 1.442695
        %v276 = vpow.pop %v275
        %v277 = vadd.f32 %v270, %v276
        %vm278 = vcmp.eq.s32.totalorder %v244, 1
        %v279 = vsel %vm278, %v274, 0.0
        %v280 = vadd.f32 %v273, %v279
        %v281 = vsub.f32 %v250, %v266
        %v282 = vmul.f32 %v281, 1.442695
        %v283 = vpow.pop %v282
        %v284 = vadd.f32 %v277, %v283
        %vm285 = vcmp.eq.s32.totalorder %v244, 2
        %v286 = vsel %vm285, %v281, 0.0
        %v287 = vadd.f32 %v280, %v286
        %v288 = vsub.f32 %v253, %v266
        %v289 = vmul.f32 %v288, 1.442695
        %v290 = vpow.pop %v289
        %v291 = vadd.f32 %v284, %v290
        %vm292 = vcmp.eq.s32.totalorder %v244, 3
        %v293 = vsel %vm292, %v288, 0.0
        %v294 = vadd.f32 %v287, %v293
        %v295 = vsub.f32 %v256, %v266
        %v296 = vmul.f32 %v295, 1.442695
        %v297 = vpow.pop %v296
        %v298 = vadd.f32 %v291, %v297
        %vm299 = vcmp.eq.s32.totalorder %v244, 4
        %v300 = vsel %vm299, %v295, 0.0
        %v301 = vadd.f32 %v294, %v300
        %v302 = vsub.f32 %v259, %v266
        %v303 = vmul.f32 %v302, 1.442695
        %v304 = vpow.pop %v303
        %v305 = vadd.f32 %v298, %v304
        %vm306 = vcmp.eq.s32.totalorder %v244, 5
        %v307 = vsel %vm306, %v302, 0.0
        %v308 = vadd.f32 %v301, %v307
        %v309 = vsub.f32 %v262, %v266
        %v310 = vmul.f32 %v309, 1.442695
        %v311 = vpow.pop %v310
        %v312 = vadd.f32 %v305, %v311
        %vm313 = vcmp.eq.s32.totalorder %v244, 6
        %v314 = vsel %vm313, %v309, 0.0
        %v315 = vadd.f32 %v308, %v314
        %v316 = vsub.f32 %v265, %v266
        %v317 = vmul.f32 %v316, 1.442695
        %v318 = vpow.pop %v317
        %v319 = vadd.f32 %v312, %v318
        %vm320 = vcmp.eq.s32.totalorder %v244, 7
        %v321 = vsel %vm320, %v316, 0.0
        %v322 = vadd.f32 %v315, %v321
        %vm323 = vcmp.ne.s32.totalorder %v244, 4294967295
        %v324 = vlog2.pop %v319
        %v325 = vmul.f32 %v324, 0.6931472
        %v326 = vsub.f32 %v325, %v322
        %v327 = vsel %vm323, %v326, 0.0
        %v328 = vadd.f32 %v327, 0.0
        %vm329 = vcmask 130048
        %v330 = vsel %vm329, %v328, 0.0
        %331 = vadd.xlane.f32.xlu0 %v330
        %v332 = vpop.xlane.xlu0 %331
        %v333 = vrot.slane %v332, 4
        %v334 = vadd.f32 %v332, %v333
        %v335 = vrot.slane %v334, 2
        %v336 = vadd.f32 %v334, %v335
        %v337 = vrot.slane %v336, 1
        %v338 = vadd.f32 %v336, %v337
        %s339 = vtos %v338
        %v340 = vstv %s339
        %vm341 = vcmask 0
        %342 = vst.msk [vmem:[%s240] sm:$0x1] %vm341, %v340
        %s343 = smul.u32 %s24, 2
        %s344 = sadd.s32 %s343, %s25
        %s345 = sadd.s32 %s344, %s26
        %p346 = scmp.lt.s32.totalorder %s345, 3
        %s347 = scalar_select %p346, %s345, 3
        %s348 = scalar_lea.vmem %s2, %s347
        // Predicated region
        $region37: #{tpu_custom_call.1} parent=27 // pred_check
          %p349 = pneg %p122
        $region38: #{tpu_custom_call.1} parent=27 // pred_check_branch
          %351 = sbr.rel (%p349) target = $region40
        $region39: #{tpu_custom_call.1} parent=27 // pred_region
          %s352 = smul.u32 %s24, 2
          %s353 = sadd.s32 %s352, %s25
          %s354 = sadd.s32 %s353, %s26
        $region40: #{tpu_custom_call.1} parent=27 // pred_fallthru
          _
      $region28: #{tpu_custom_call.1} parent=5 // pred_fallthru
        _
      %p355 = scmp.le.s32.totalorder 2, %s14
      // Predicated region
      $region41: #{tpu_custom_call.1} parent=5 // pred_check
        %p356 = pneg %p355
      $region42: #{tpu_custom_call.1} parent=5 // pred_check_branch
        %358 = sbr.rel (%p356) target = $region44
      $region43: #{tpu_custom_call.1} parent=5 // pred_region
        %s359 = ssub.s32 %s14, 2
        // Predicated region
        $region45: #{tpu_custom_call.1} parent=43 // pred_check
          %p360 = pneg %p128
        $region46: #{tpu_custom_call.1} parent=43 // pred_check_branch
          %362 = sbr.rel (%p360) target = $region48
        $region47: #{tpu_custom_call.1} parent=43 // pred_region
          %s363 = smul.u32 %s27, 2
          %s364 = sadd.s32 %s363, %s28
          %s365 = sadd.s32 %s364, %s29
          %p366 = scmp.lt.s32.totalorder %s365, 3
          %s367 = scalar_select %p366, %s365, 3
          %s368 = scalar_lea.vmem %s2, %s367
        $region48: #{tpu_custom_call.1} parent=43 // pred_fallthru
          _
      $region44: #{tpu_custom_call.1} parent=5 // pred_fallthru
        _
    $region6: #{tpu_custom_call.1} parent=1 // loop_footer
      %s18 = sadd.s32 1, %s14
    $region7: #{tpu_custom_call.1} parent=1 // loop_footer_branch
      %13 = sbr.rel target = $region3
    $region8: #{tpu_custom_call.1} parent=1 // loop_exit
      _
    %369 = vsyncpa [#allocation3], 1
    %s370 = scalar_lea.sflag [#allocation3], 1
    %371 = vsyncpa %s370, 1
    %372 = vsyncpa [#allocation5], 1
    %s373 = scalar_lea.sflag [#allocation5], 1
    %374 = vsyncpa %s373, 1

</llo_original>
